<compile_context>
chip_gen: v5e
topology: v5e:2x2
jax: 0.10.0
libtpu: 0.0.40
codegen_flags: <defaults>
</compile_context>

<pallas_src>
import functools

import jax
import jax.numpy as jnp
from jax.experimental import pallas as pl
from jax.experimental.pallas import tpu as pltpu


def _round_up(x: int, m: int) -> int:
    return ((x + m - 1) // m) * m


def make_freq_bands(N_freqs: int, logscale: bool = True):
    if logscale:
        # 2 ** linspace(0, N_freqs-1, N_freqs) == [1, 2, 4, ...] (exact in f32)
        bands = 2.0 ** jnp.linspace(0.0, max(N_freqs - 1, 0), N_freqs)
    else:
        bands = jnp.linspace(1.0, 2.0 ** max(N_freqs - 1, 0), N_freqs)
    return bands.astype(jnp.float32)


def _pick_tile(R: int, target_rows: int):
    """R is a multiple of 8.  Return (r_tile, R_pad) with r_tile a multiple of
    8, R_pad a multiple of r_tile, and padding bounded to <= ~6.25% of R."""
    target = max(8, min(_round_up(target_rows, 8), _round_up(R, 8)))
    t = target
    while t > 8:
        pad = (-R) % t
        if pad * 16 <= R:          # accept <= 6.25% wasted rows
            return t, R + pad
        t -= 8
    return 8, R                    # R is a multiple of 8 -> zero padding


def _embedding_kernel(x_ref, o_ref, *, freqs, use_doubling, resync_every):
    # x_ref: (r_tile, 128) flat block (fully dense, 8/8 sublane occupancy).
    # o_ref: (K, r_tile, 128), K = 2*len(freqs) + 1; each o_ref[k] store is an
    #        exactly tile-aligned, unmasked (r_tile, 128) slab.
    x = x_ref[...]
    o_ref[0] = x.astype(o_ref.dtype)                # identity piece
    xf32 = x.astype(jnp.float32)

    s = c = None
    for j, f in enumerate(freqs):                   # static unroll; f is const
        if (not use_doubling) or (j % resync_every == 0):
            a = f * xf32
            s = jnp.sin(a)
            c = jnp.cos(a)
        else:
            # f_j == 2*f_{j-1} (verified at trace time): double-angle on the
            # VPU instead of two EUP transcendentals.
            s, c = 2.0 * s * c, 1.0 - 2.0 * s * s
        o_ref[2 * j + 1] = s.astype(o_ref.dtype)
        o_ref[2 * j + 2] = c.astype(o_ref.dtype)


def embedding_forward(x, N_freqs: int, logscale: bool = True, *,
                      tile_rows: int = 512, resync_every: int = 4,
                      out_dtype=None):
    """Pallas implementation of Embedding.forward.

    x: (N, in_channels) float array.
    returns: (N, in_channels * (2*N_freqs + 1)) in torch.cat ordering
    [x, sin(f0 x), cos(f0 x), sin(f1 x), cos(f1 x), ...].

    Note: larger `resync_every` trades accuracy of the high-frequency terms
    for fewer transcendentals; the default (4) keeps error ~1e-6.
    """
    N, C = x.shape
    K = 2 * N_freqs + 1
    out_dtype = x.dtype if out_dtype is None else jnp.dtype(out_dtype)
    resync_every = max(1, int(resync_every))

    freqs = tuple(float(v) for v in make_freq_bands(N_freqs, logscale))
    # Guard the double-angle path: only valid if consecutive bands are exactly
    # 2x apart (true for logscale=True powers of two; checked, not assumed).
    use_doubling = (len(freqs) > 1
                    and all(freqs[j] == 2.0 * freqs[j - 1]
                            for j in range(1, len(freqs))))

    # --- flat layout: (N*C,) padded to a multiple of 8*128, viewed (R, 128) --
    L = N * C
    L_pad128 = _round_up(max(L, 1), 8 * 128)
    R = L_pad128 // 128

    in_isz = jnp.dtype(x.dtype).itemsize
    out_isz = jnp.dtype(out_dtype).itemsize

    # Cap the tile so double-buffered in+out blocks stay under ~24 MiB.
    budget = 24 << 20
    per_row_bytes = 2 * 128 * (K * out_isz + in_isz)
    cap_rows = max(8, (budget // per_row_bytes) // 8 * 8)
    r_tile, R_pad = _pick_tile(R, min(int(tile_rows), cap_rows))
    steps = R_pad // r_tile
    if steps == 1 and R >= 64:
        # Keep >=2 grid steps for large inputs so both v7x cores get work.
        r_tile = _round_up((R + 1) // 2, 8)
        R_pad = 2 * r_tile
        steps = 2

    x_flat = x.reshape(-1)
    flat_pad = R_pad * 128
    if flat_pad != L:
        x_flat = jnp.pad(x_flat, (0, flat_pad - L))
    x2d = x_flat.reshape(R_pad, 128)

    kernel = functools.partial(
        _embedding_kernel, freqs=freqs, use_doubling=use_doubling,
        resync_every=resync_every)

    in_block_bytes = r_tile * 128 * in_isz
    out_block_bytes = K * r_tile * 128 * out_isz
    vmem_need = 2 * (in_block_bytes + out_block_bytes) + (2 << 20)
    vmem_limit = int(min(max(vmem_need, 16 << 20), 32 << 20))

    elems = R_pad * 128
    n_anchor = -(-N_freqs // resync_every) if use_doubling else N_freqs
    cost = pl.CostEstimate(
        flops=int((3 * N_freqs + 1) * elems),
        transcendentals=int(2 * n_anchor * elems),
        bytes_accessed=int(elems * in_isz + K * elems * out_isz),
    )

    o = pl.pallas_call(
        kernel,
        out_shape=jax.ShapeDtypeStruct((K, R_pad, 128), out_dtype),
        grid=(steps,),
        # Last two block dims are (r_tile, 128): exact (8,128) tile multiples,
        # so every load/store is dense and unmasked with zero sublane padding.
        in_specs=[pl.BlockSpec((r_tile, 128), lambda i: (i, 0))],
        out_specs=pl.BlockSpec((K, r_tile, 128), lambda i: (0, i, 0)),
        compiler_params=pltpu.CompilerParams(
            dimension_semantics=("parallel",),   # megacore-shardable on v7x
            vmem_limit_bytes=vmem_limit,
        ),
        cost_estimate=cost,
    )(x2d)

    # Real (not free) rearrangement to torch.cat ordering, left to XLA:
    # (K, R_pad*128) -> slice valid -> (K, N, C) -> (N, K, C) -> (N, K*C).
    # See TODO(synk) above about fusing this into the consumer matmul instead.
    o = o.reshape(K, flat_pad)[:, :L].reshape(K, N, C)
    return jnp.transpose(o, (1, 0, 2)).reshape(N, K * C)


def embedding_reference(x, N_freqs: int, logscale: bool = True):
    bands = make_freq_bands(N_freqs, logscale)
    out = [x]
    for f in bands:
        out.append(jnp.sin(f * x))
        out.append(jnp.cos(f * x))
    return jnp.concatenate(out, axis=-1)


if __name__ == "__main__":
    key = jax.random.PRNGKey(0)
    k1, k2 = jax.random.split(key)

    # Typical NeRF xyz embedding at small scale.  N*C = 3000 is not a multiple
    # of 1024, exercising the flat-padding path; tile_rows=8 forces a
    # multi-step "parallel" grid even at this size.  Power-of-two bands
    # exercise the guarded double-angle path.
    N, C, F = 1000, 3, 10
    x = jax.random.normal(k1, (N, C), dtype=jnp.float32)
    out = jax.block_until_ready(
        embedding_forward(x, N_freqs=F, logscale=True, tile_rows=8))
    ref = embedding_reference(x, N_freqs=F, logscale=True)
    assert out.shape == (N, C * (2 * F + 1)), out.shape
    assert jnp.allclose(out, ref, atol=5e-5, rtol=1e-5), (
        "mismatch vs reference (logscale=True)")

    # Non-log bands: direct sin/cos path (doubling guard rejects), different
    # channel count, single-step grid.
    N2, C2, F2 = 250, 4, 4
    x2 = jax.random.normal(k2, (N2, C2), dtype=jnp.float32)
    out2 = jax.block_until_ready(
        embedding_forward(x2, N_freqs=F2, logscale=False))
    ref2 = embedding_reference(x2, N_freqs=F2, logscale=False)
    assert out2.shape == (N2, C2 * (2 * F2 + 1)), out2.shape
    assert jnp.allclose(out2, ref2, atol=1e-5, rtol=1e-5), (
        "mismatch vs reference (logscale=False)")

    print("KERNEL_OK")
</pallas_src>

<mosaic_0001>
module attributes {stable_mosaic.version = 11 : i64} {
  func.func @_embedding_kernel(%arg0: i32, %arg1: memref<8x128xf32, #tpu.memory_space<vmem>>, %arg2: memref<21x8x128xf32, #tpu.memory_space<vmem>>) attributes {dimension_semantics = [#tpu.dimension_semantics<parallel>], iteration_bounds = array<i64: 3>, scalar_prefetch = 0 : i64, scratch_operands = 0 : i64, tpu.core_type = #tpu.core_type<tc>, window_params = [{transform_indices = @transform_0, window_bounds = array<i64: 8, 128>}, {transform_indices = @transform_1, window_bounds = array<i64: 21, 8, 128>}]} {
    %c0 = arith.constant 0 : index
    %c0_0 = arith.constant 0 : index
    %0 = vector.load %arg1[%c0, %c0_0] : memref<8x128xf32, #tpu.memory_space<vmem>>, vector<8x128xf32>
    %c0_1 = arith.constant 0 : index
    %c0_2 = arith.constant 0 : index
    %c0_3 = arith.constant 0 : index
    %1 = vector.load %arg2[%c0_1, %c0_2, %c0_3] : memref<21x8x128xf32, #tpu.memory_space<vmem>>, vector<1x8x128xf32>
    %2 = vector.shape_cast %1 : vector<1x8x128xf32> to vector<8x128xf32>
    %3 = vector.shape_cast %0 : vector<8x128xf32> to vector<1x8x128xf32>
    tpu.vector_store %arg2[%c0_1, %c0_2, %c0_3], %3 {strides = array<i32>} : memref<21x8x128xf32, #tpu.memory_space<vmem>>, vector<1x8x128xf32>,
    %cst = arith.constant 1.000000e+00 : f32
    %4 = vector.broadcast %cst : f32 to vector<8x128xf32>
    %5 = arith.mulf %4, %0 : vector<8x128xf32>
    %6 = math.sin %5 : vector<8x128xf32>
    %7 = math.cos %5 : vector<8x128xf32>
    %c1 = arith.constant 1 : index
    %c0_4 = arith.constant 0 : index
    %c0_5 = arith.constant 0 : index
    %8 = vector.load %arg2[%c1, %c0_4, %c0_5] : memref<21x8x128xf32, #tpu.memory_space<vmem>>, vector<1x8x128xf32>
    %9 = vector.shape_cast %8 : vector<1x8x128xf32> to vector<8x128xf32>
    %10 = vector.shape_cast %6 : vector<8x128xf32> to vector<1x8x128xf32>
    tpu.vector_store %arg2[%c1, %c0_4, %c0_5], %10 {strides = array<i32>} : memref<21x8x128xf32, #tpu.memory_space<vmem>>, vector<1x8x128xf32>,
    %c2 = arith.constant 2 : index
    %c0_6 = arith.constant 0 : index
    %c0_7 = arith.constant 0 : index
    %11 = vector.load %arg2[%c2, %c0_6, %c0_7] : memref<21x8x128xf32, #tpu.memory_space<vmem>>, vector<1x8x128xf32>
    %12 = vector.shape_cast %11 : vector<1x8x128xf32> to vector<8x128xf32>
    %13 = vector.shape_cast %7 : vector<8x128xf32> to vector<1x8x128xf32>
    tpu.vector_store %arg2[%c2, %c0_6, %c0_7], %13 {strides = array<i32>} : memref<21x8x128xf32, #tpu.memory_space<vmem>>, vector<1x8x128xf32>,
    %cst_8 = arith.constant 2.000000e+00 : f32
    %14 = vector.broadcast %cst_8 : f32 to vector<8x128xf32>
    %15 = arith.mulf %14, %6 : vector<8x128xf32>
    %16 = arith.mulf %15, %7 : vector<8x128xf32>
    %cst_9 = arith.constant 2.000000e+00 : f32
    %17 = vector.broadcast %cst_9 : f32 to vector<8x128xf32>
    %18 = arith.mulf %17, %6 : vector<8x128xf32>
    %19 = arith.mulf %18, %6 : vector<8x128xf32>
    %cst_10 = arith.constant 1.000000e+00 : f32
    %20 = vector.broadcast %cst_10 : f32 to vector<8x128xf32>
    %21 = arith.subf %20, %19 : vector<8x128xf32>
    %c3 = arith.constant 3 : index
    %c0_11 = arith.constant 0 : index
    %c0_12 = arith.constant 0 : index
    %22 = vector.load %arg2[%c3, %c0_11, %c0_12] : memref<21x8x128xf32, #tpu.memory_space<vmem>>, vector<1x8x128xf32>
    %23 = vector.shape_cast %22 : vector<1x8x128xf32> to vector<8x128xf32>
    %24 = vector.shape_cast %16 : vector<8x128xf32> to vector<1x8x128xf32>
    tpu.vector_store %arg2[%c3, %c0_11, %c0_12], %24 {strides = array<i32>} : memref<21x8x128xf32, #tpu.memory_space<vmem>>, vector<1x8x128xf32>,
    %c4 = arith.constant 4 : index
    %c0_13 = arith.constant 0 : index
    %c0_14 = arith.constant 0 : index
    %25 = vector.load %arg2[%c4, %c0_13, %c0_14] : memref<21x8x128xf32, #tpu.memory_space<vmem>>, vector<1x8x128xf32>
    %26 = vector.shape_cast %25 : vector<1x8x128xf32> to vector<8x128xf32>
    %27 = vector.shape_cast %21 : vector<8x128xf32> to vector<1x8x128xf32>
    tpu.vector_store %arg2[%c4, %c0_13, %c0_14], %27 {strides = array<i32>} : memref<21x8x128xf32, #tpu.memory_space<vmem>>, vector<1x8x128xf32>,
    %cst_15 = arith.constant 2.000000e+00 : f32
    %28 = vector.broadcast %cst_15 : f32 to vector<8x128xf32>
    %29 = arith.mulf %28, %16 : vector<8x128xf32>
    %30 = arith.mulf %29, %21 : vector<8x128xf32>
    %cst_16 = arith.constant 2.000000e+00 : f32
    %31 = vector.broadcast %cst_16 : f32 to vector<8x128xf32>
    %32 = arith.mulf %31, %16 : vector<8x128xf32>
    %33 = arith.mulf %32, %16 : vector<8x128xf32>
    %cst_17 = arith.constant 1.000000e+00 : f32
    %34 = vector.broadcast %cst_17 : f32 to vector<8x128xf32>
    %35 = arith.subf %34, %33 : vector<8x128xf32>
    %c5 = arith.constant 5 : index
    %c0_18 = arith.constant 0 : index
    %c0_19 = arith.constant 0 : index
    %36 = vector.load %arg2[%c5, %c0_18, %c0_19] : memref<21x8x128xf32, #tpu.memory_space<vmem>>, vector<1x8x128xf32>
    %37 = vector.shape_cast %36 : vector<1x8x128xf32> to vector<8x128xf32>
    %38 = vector.shape_cast %30 : vector<8x128xf32> to vector<1x8x128xf32>
    tpu.vector_store %arg2[%c5, %c0_18, %c0_19], %38 {strides = array<i32>} : memref<21x8x128xf32, #tpu.memory_space<vmem>>, vector<1x8x128xf32>,
    %c6 = arith.constant 6 : index
    %c0_20 = arith.constant 0 : index
    %c0_21 = arith.constant 0 : index
    %39 = vector.load %arg2[%c6, %c0_20, %c0_21] : memref<21x8x128xf32, #tpu.memory_space<vmem>>, vector<1x8x128xf32>
    %40 = vector.shape_cast %39 : vector<1x8x128xf32> to vector<8x128xf32>
    %41 = vector.shape_cast %35 : vector<8x128xf32> to vector<1x8x128xf32>
    tpu.vector_store %arg2[%c6, %c0_20, %c0_21], %41 {strides = array<i32>} : memref<21x8x128xf32, #tpu.memory_space<vmem>>, vector<1x8x128xf32>,
    %cst_22 = arith.constant 2.000000e+00 : f32
    %42 = vector.broadcast %cst_22 : f32 to vector<8x128xf32>
    %43 = arith.mulf %42, %30 : vector<8x128xf32>
    %44 = arith.mulf %43, %35 : vector<8x128xf32>
    %cst_23 = arith.constant 2.000000e+00 : f32
    %45 = vector.broadcast %cst_23 : f32 to vector<8x128xf32>
    %46 = arith.mulf %45, %30 : vector<8x128xf32>
    %47 = arith.mulf %46, %30 : vector<8x128xf32>
    %cst_24 = arith.constant 1.000000e+00 : f32
    %48 = vector.broadcast %cst_24 : f32 to vector<8x128xf32>
    %49 = arith.subf %48, %47 : vector<8x128xf32>
    %c7 = arith.constant 7 : index
    %c0_25 = arith.constant 0 : index
    %c0_26 = arith.constant 0 : index
    %50 = vector.load %arg2[%c7, %c0_25, %c0_26] : memref<21x8x128xf32, #tpu.memory_space<vmem>>, vector<1x8x128xf32>
    %51 = vector.shape_cast %50 : vector<1x8x128xf32> to vector<8x128xf32>
    %52 = vector.shape_cast %44 : vector<8x128xf32> to vector<1x8x128xf32>
    tpu.vector_store %arg2[%c7, %c0_25, %c0_26], %52 {strides = array<i32>} : memref<21x8x128xf32, #tpu.memory_space<vmem>>, vector<1x8x128xf32>,
    %c8 = arith.constant 8 : index
    %c0_27 = arith.constant 0 : index
    %c0_28 = arith.constant 0 : index
    %53 = vector.load %arg2[%c8, %c0_27, %c0_28] : memref<21x8x128xf32, #tpu.memory_space<vmem>>, vector<1x8x128xf32>
    %54 = vector.shape_cast %53 : vector<1x8x128xf32> to vector<8x128xf32>
    %55 = vector.shape_cast %49 : vector<8x128xf32> to vector<1x8x128xf32>
    tpu.vector_store %arg2[%c8, %c0_27, %c0_28], %55 {strides = array<i32>} : memref<21x8x128xf32, #tpu.memory_space<vmem>>, vector<1x8x128xf32>,
    %cst_29 = arith.constant 1.600000e+01 : f32
    %56 = vector.broadcast %cst_29 : f32 to vector<8x128xf32>
    %57 = arith.mulf %56, %0 : vector<8x128xf32>
    %58 = math.sin %57 : vector<8x128xf32>
    %59 = math.cos %57 : vector<8x128xf32>
    %c9 = arith.constant 9 : index
    %c0_30 = arith.constant 0 : index
    %c0_31 = arith.constant 0 : index
    %60 = vector.load %arg2[%c9, %c0_30, %c0_31] : memref<21x8x128xf32, #tpu.memory_space<vmem>>, vector<1x8x128xf32>
    %61 = vector.shape_cast %60 : vector<1x8x128xf32> to vector<8x128xf32>
    %62 = vector.shape_cast %58 : vector<8x128xf32> to vector<1x8x128xf32>
    tpu.vector_store %arg2[%c9, %c0_30, %c0_31], %62 {strides = array<i32>} : memref<21x8x128xf32, #tpu.memory_space<vmem>>, vector<1x8x128xf32>,
    %c10 = arith.constant 10 : index
    %c0_32 = arith.constant 0 : index
    %c0_33 = arith.constant 0 : index
    %63 = vector.load %arg2[%c10, %c0_32, %c0_33] : memref<21x8x128xf32, #tpu.memory_space<vmem>>, vector<1x8x128xf32>
    %64 = vector.shape_cast %63 : vector<1x8x128xf32> to vector<8x128xf32>
    %65 = vector.shape_cast %59 : vector<8x128xf32> to vector<1x8x128xf32>
    tpu.vector_store %arg2[%c10, %c0_32, %c0_33], %65 {strides = array<i32>} : memref<21x8x128xf32, #tpu.memory_space<vmem>>, vector<1x8x128xf32>,
    %cst_34 = arith.constant 2.000000e+00 : f32
    %66 = vector.broadcast %cst_34 : f32 to vector<8x128xf32>
    %67 = arith.mulf %66, %58 : vector<8x128xf32>
    %68 = arith.mulf %67, %59 : vector<8x128xf32>
    %cst_35 = arith.constant 2.000000e+00 : f32
    %69 = vector.broadcast %cst_35 : f32 to vector<8x128xf32>
    %70 = arith.mulf %69, %58 : vector<8x128xf32>
    %71 = arith.mulf %70, %58 : vector<8x128xf32>
    %cst_36 = arith.constant 1.000000e+00 : f32
    %72 = vector.broadcast %cst_36 : f32 to vector<8x128xf32>
    %73 = arith.subf %72, %71 : vector<8x128xf32>
    %c11 = arith.constant 11 : index
    %c0_37 = arith.constant 0 : index
    %c0_38 = arith.constant 0 : index
    %74 = vector.load %arg2[%c11, %c0_37, %c0_38] : memref<21x8x128xf32, #tpu.memory_space<vmem>>, vector<1x8x128xf32>
    %75 = vector.shape_cast %74 : vector<1x8x128xf32> to vector<8x128xf32>
    %76 = vector.shape_cast %68 : vector<8x128xf32> to vector<1x8x128xf32>
    tpu.vector_store %arg2[%c11, %c0_37, %c0_38], %76 {strides = array<i32>} : memref<21x8x128xf32, #tpu.memory_space<vmem>>, vector<1x8x128xf32>,
    %c12 = arith.constant 12 : index
    %c0_39 = arith.constant 0 : index
    %c0_40 = arith.constant 0 : index
    %77 = vector.load %arg2[%c12, %c0_39, %c0_40] : memref<21x8x128xf32, #tpu.memory_space<vmem>>, vector<1x8x128xf32>
    %78 = vector.shape_cast %77 : vector<1x8x128xf32> to vector<8x128xf32>
    %79 = vector.shape_cast %73 : vector<8x128xf32> to vector<1x8x128xf32>
    tpu.vector_store %arg2[%c12, %c0_39, %c0_40], %79 {strides = array<i32>} : memref<21x8x128xf32, #tpu.memory_space<vmem>>, vector<1x8x128xf32>,
    %cst_41 = arith.constant 2.000000e+00 : f32
    %80 = vector.broadcast %cst_41 : f32 to vector<8x128xf32>
    %81 = arith.mulf %80, %68 : vector<8x128xf32>
    %82 = arith.mulf %81, %73 : vector<8x128xf32>
    %cst_42 = arith.constant 2.000000e+00 : f32
    %83 = vector.broadcast %cst_42 : f32 to vector<8x128xf32>
    %84 = arith.mulf %83, %68 : vector<8x128xf32>
    %85 = arith.mulf %84, %68 : vector<8x128xf32>
    %cst_43 = arith.constant 1.000000e+00 : f32
    %86 = vector.broadcast %cst_43 : f32 to vector<8x128xf32>
    %87 = arith.subf %86, %85 : vector<8x128xf32>
    %c13 = arith.constant 13 : index
    %c0_44 = arith.constant 0 : index
    %c0_45 = arith.constant 0 : index
    %88 = vector.load %arg2[%c13, %c0_44, %c0_45] : memref<21x8x128xf32, #tpu.memory_space<vmem>>, vector<1x8x128xf32>
    %89 = vector.shape_cast %88 : vector<1x8x128xf32> to vector<8x128xf32>
    %90 = vector.shape_cast %82 : vector<8x128xf32> to vector<1x8x128xf32>
    tpu.vector_store %arg2[%c13, %c0_44, %c0_45], %90 {strides = array<i32>} : memref<21x8x128xf32, #tpu.memory_space<vmem>>, vector<1x8x128xf32>,
    %c14 = arith.constant 14 : index
    %c0_46 = arith.constant 0 : index
    %c0_47 = arith.constant 0 : index
    %91 = vector.load %arg2[%c14, %c0_46, %c0_47] : memref<21x8x128xf32, #tpu.memory_space<vmem>>, vector<1x8x128xf32>
    %92 = vector.shape_cast %91 : vector<1x8x128xf32> to vector<8x128xf32>
    %93 = vector.shape_cast %87 : vector<8x128xf32> to vector<1x8x128xf32>
    tpu.vector_store %arg2[%c14, %c0_46, %c0_47], %93 {strides = array<i32>} : memref<21x8x128xf32, #tpu.memory_space<vmem>>, vector<1x8x128xf32>,
    %cst_48 = arith.constant 2.000000e+00 : f32
    %94 = vector.broadcast %cst_48 : f32 to vector<8x128xf32>
    %95 = arith.mulf %94, %82 : vector<8x128xf32>
    %96 = arith.mulf %95, %87 : vector<8x128xf32>
    %cst_49 = arith.constant 2.000000e+00 : f32
    %97 = vector.broadcast %cst_49 : f32 to vector<8x128xf32>
    %98 = arith.mulf %97, %82 : vector<8x128xf32>
    %99 = arith.mulf %98, %82 : vector<8x128xf32>
    %cst_50 = arith.constant 1.000000e+00 : f32
    %100 = vector.broadcast %cst_50 : f32 to vector<8x128xf32>
    %101 = arith.subf %100, %99 : vector<8x128xf32>
    %c15 = arith.constant 15 : index
    %c0_51 = arith.constant 0 : index
    %c0_52 = arith.constant 0 : index
    %102 = vector.load %arg2[%c15, %c0_51, %c0_52] : memref<21x8x128xf32, #tpu.memory_space<vmem>>, vector<1x8x128xf32>
    %103 = vector.shape_cast %102 : vector<1x8x128xf32> to vector<8x128xf32>
    %104 = vector.shape_cast %96 : vector<8x128xf32> to vector<1x8x128xf32>
    tpu.vector_store %arg2[%c15, %c0_51, %c0_52], %104 {strides = array<i32>} : memref<21x8x128xf32, #tpu.memory_space<vmem>>, vector<1x8x128xf32>,
    %c16 = arith.constant 16 : index
    %c0_53 = arith.constant 0 : index
    %c0_54 = arith.constant 0 : index
    %105 = vector.load %arg2[%c16, %c0_53, %c0_54] : memref<21x8x128xf32, #tpu.memory_space<vmem>>, vector<1x8x128xf32>
    %106 = vector.shape_cast %105 : vector<1x8x128xf32> to vector<8x128xf32>
    %107 = vector.shape_cast %101 : vector<8x128xf32> to vector<1x8x128xf32>
    tpu.vector_store %arg2[%c16, %c0_53, %c0_54], %107 {strides = array<i32>} : memref<21x8x128xf32, #tpu.memory_space<vmem>>, vector<1x8x128xf32>,
    %cst_55 = arith.constant 2.560000e+02 : f32
    %108 = vector.broadcast %cst_55 : f32 to vector<8x128xf32>
    %109 = arith.mulf %108, %0 : vector<8x128xf32>
    %110 = math.sin %109 : vector<8x128xf32>
    %111 = math.cos %109 : vector<8x128xf32>
    %c17 = arith.constant 17 : index
    %c0_56 = arith.constant 0 : index
    %c0_57 = arith.constant 0 : index
    %112 = vector.load %arg2[%c17, %c0_56, %c0_57] : memref<21x8x128xf32, #tpu.memory_space<vmem>>, vector<1x8x128xf32>
    %113 = vector.shape_cast %112 : vector<1x8x128xf32> to vector<8x128xf32>
    %114 = vector.shape_cast %110 : vector<8x128xf32> to vector<1x8x128xf32>
    tpu.vector_store %arg2[%c17, %c0_56, %c0_57], %114 {strides = array<i32>} : memref<21x8x128xf32, #tpu.memory_space<vmem>>, vector<1x8x128xf32>,
    %c18 = arith.constant 18 : index
    %c0_58 = arith.constant 0 : index
    %c0_59 = arith.constant 0 : index
    %115 = vector.load %arg2[%c18, %c0_58, %c0_59] : memref<21x8x128xf32, #tpu.memory_space<vmem>>, vector<1x8x128xf32>
    %116 = vector.shape_cast %115 : vector<1x8x128xf32> to vector<8x128xf32>
    %117 = vector.shape_cast %111 : vector<8x128xf32> to vector<1x8x128xf32>
    tpu.vector_store %arg2[%c18, %c0_58, %c0_59], %117 {strides = array<i32>} : memref<21x8x128xf32, #tpu.memory_space<vmem>>, vector<1x8x128xf32>,
    %cst_60 = arith.constant 2.000000e+00 : f32
    %118 = vector.broadcast %cst_60 : f32 to vector<8x128xf32>
    %119 = arith.mulf %118, %110 : vector<8x128xf32>
    %120 = arith.mulf %119, %111 : vector<8x128xf32>
    %cst_61 = arith.constant 2.000000e+00 : f32
    %121 = vector.broadcast %cst_61 : f32 to vector<8x128xf32>
    %122 = arith.mulf %121, %110 : vector<8x128xf32>
    %123 = arith.mulf %122, %110 : vector<8x128xf32>
    %cst_62 = arith.constant 1.000000e+00 : f32
    %124 = vector.broadcast %cst_62 : f32 to vector<8x128xf32>
    %125 = arith.subf %124, %123 : vector<8x128xf32>
    %c19 = arith.constant 19 : index
    %c0_63 = arith.constant 0 : index
    %c0_64 = arith.constant 0 : index
    %126 = vector.load %arg2[%c19, %c0_63, %c0_64] : memref<21x8x128xf32, #tpu.memory_space<vmem>>, vector<1x8x128xf32>
    %127 = vector.shape_cast %126 : vector<1x8x128xf32> to vector<8x128xf32>
    %128 = vector.shape_cast %120 : vector<8x128xf32> to vector<1x8x128xf32>
    tpu.vector_store %arg2[%c19, %c0_63, %c0_64], %128 {strides = array<i32>} : memref<21x8x128xf32, #tpu.memory_space<vmem>>, vector<1x8x128xf32>,
    %c20 = arith.constant 20 : index
    %c0_65 = arith.constant 0 : index
    %c0_66 = arith.constant 0 : index
    %129 = vector.load %arg2[%c20, %c0_65, %c0_66] : memref<21x8x128xf32, #tpu.memory_space<vmem>>, vector<1x8x128xf32>
    %130 = vector.shape_cast %129 : vector<1x8x128xf32> to vector<8x128xf32>
    %131 = vector.shape_cast %125 : vector<8x128xf32> to vector<1x8x128xf32>
    tpu.vector_store %arg2[%c20, %c0_65, %c0_66], %131 {strides = array<i32>} : memref<21x8x128xf32, #tpu.memory_space<vmem>>, vector<1x8x128xf32>,
    return
  }
  func.func @transform_0(%arg0: i32) -> (i32, i32) {
    %c0_i32 = arith.constant 0 : i32
    %c0_i32_0 = arith.constant 0 : i32
    return %arg0, %c0_i32 : i32, i32
  }
  func.func @transform_1(%arg0: i32) -> (i32, i32, i32) {
    %c0_i32 = arith.constant 0 : i32
    %c0_i32_0 = arith.constant 0 : i32
    %c0_i32_1 = arith.constant 0 : i32
    return %c0_i32, %arg0, %c0_i32_0 : i32, i32, i32
  }
}

</mosaic_0001>

<llo_original>
// kernel: tpu_custom_call.1
$region0: #{tpu_custom_call.1}
  #allocation0 [shape = 'u32[]', space=smem, size = 0x4, offset = 0x4, fixed_abs, tag = 'smem constant byte address 0x4 - core index']
  #allocation1 [shape = 'u32[72,128]{1,0:T(1,128)}', space=vmem, size = 0x9000, scoped, tag = 'internal scratch']
  %s0 = inlined_call_operand.hbm [shape: f32[24,128], index: 0, kind: input, shape index: {}]
  %s1 = inlined_call_operand.hbm [shape: f32[21,24,128], index: 1, kind: output, shape index: {}]
  %s2 = sld [smem:[#allocation0]]
  $region41: #{tpu_custom_call.1} parent=0
    _
  %s4 = ssub.s32 1, %s2
  %s5 = scalar_select 0, %s4, %s2
  $region1: #{tpu_custom_call.1} parent=0
    #allocation2 [shape = 'u8[8192]{0}', space=vmem, size = 0x2000, scoped, tag = 'input window, operand 0']
    #allocation3 [shape = 's32[2]{0}', space=sflag, size = 0x8, scoped, tag = 'scoped memory for tpu_custom_call.1']
    #allocation4 [shape = 's32[2]{0}', space=sflag, size = 0x8, scoped, tag = 'scoped memory for tpu_custom_call.1']
    #allocation5 [shape = 'u8[172032]{0}', space=vmem, size = 0x2a000, scoped, tag = 'output window, operand 0']
    %6 = vsyncpa [#allocation3], 0
    %s7 = scalar_lea.sflag [#allocation3], 1
    %8 = vsyncpa %s7, 0
    %9 = vsyncpa [#allocation4], 0
    %s10 = scalar_lea.sflag [#allocation4], 1
    %11 = vsyncpa %s10, 0
    loop: start=0, step=1, limit=5
    $region2: #{tpu_custom_call.1} parent=1 // loop_pre_header
      _
    $region3: #{tpu_custom_call.1} parent=1 // loop_header
      %s13 = sphi 0, %s17
      %p14 = scmp.ge.s32.totalorder %s13, 5
      %s23 = sphi 0, %s25
      %s26 = sphi 0, %s23
      %s27 = sphi 0, %s26
      %s43 = sphi 0, %s27
      %s49 = sphi 0, %s51
      %s52 = sphi 0, %s49
      %s53 = sphi 0, %s52
      %s69 = sphi 0, %s53
    $region4: #{tpu_custom_call.1} parent=1 // loop_header_branch
      %16 = sbr.rel (%p14) target = $region8
    $region5: #{tpu_custom_call.1} parent=1 // loop_body
      %s18 = ssub.s32 %s13, 1
      %s19 = ssub.s32 %s13, 2
      %s20 = sadd.s32 %s13, 1
      %s21 = ssub.s32 %s13, %s20
      %p22 = scmp.eq.s32.totalorder %s21, 0
      %s24 = sadd.s32 %s23, 1
      %s25 = scalar_select %p22, %s23, %s24
      %p28 = pneg %p22
      %p29 = scmp.eq.s32.totalorder %s13, 2
      %p30 = por %p28, %p29
      %p31 = scmp.ne.s32.totalorder %s23, %s26
      %p32 = scmp.eq.s32.totalorder %s13, 0
      %p33 = por %p31, %p32
      %p34 = scmp.ne.s32.totalorder %s23, %s26
      %p35 = scmp.eq.s32.totalorder %s18, 2
      %p36 = por %p34, %p35
      %p37 = scmp.ne.s32.totalorder %s26, %s27
      %p38 = scmp.eq.s32.totalorder %s18, 0
      %p39 = por %p37, %p38
      %p40 = scmp.ne.s32.totalorder %s26, %s27
      %p41 = scmp.eq.s32.totalorder %s19, 2
      %p42 = por %p40, %p41
      %p44 = scmp.ne.s32.totalorder %s27, %s43
      %p45 = scmp.eq.s32.totalorder %s19, 0
      %p46 = por %p44, %p45
      %s47 = ssub.s32 %s13, %s20
      %p48 = scmp.eq.s32.totalorder %s47, 0
      %s50 = sadd.s32 %s49, 1
      %s51 = scalar_select %p48, %s49, %s50
      %p54 = pneg %p48
      %p55 = scmp.eq.s32.totalorder %s13, 2
      %p56 = por %p54, %p55
      %p57 = scmp.ne.s32.totalorder %s49, %s52
      %p58 = scmp.eq.s32.totalorder %s13, 0
      %p59 = por %p57, %p58
      %p60 = scmp.ne.s32.totalorder %s49, %s52
      %p61 = scmp.eq.s32.totalorder %s18, 2
      %p62 = por %p60, %p61
      %p63 = scmp.ne.s32.totalorder %s52, %s53
      %p64 = scmp.eq.s32.totalorder %s18, 0
      %p65 = por %p63, %p64
      %p66 = scmp.ne.s32.totalorder %s52, %s53
      %p67 = scmp.eq.s32.totalorder %s19, 2
      %p68 = por %p66, %p67
      %p70 = scmp.ne.s32.totalorder %s53, %s69
      %p71 = scmp.eq.s32.totalorder %s19, 0
      %p72 = por %p70, %p71
      %p73 = scmp.le.s32.totalorder 1, %s13
      %p74 = scmp.lt.s32.totalorder %s13, 4
      %p75 = pnand %p73, %p74
      %p76 = pneg %p75
      // Predicated region
      $region9: #{tpu_custom_call.1} parent=5 // pred_check
        _
      $region10: #{tpu_custom_call.1} parent=5 // pred_check_branch
        %78 = sbr.rel (%p75) target = $region12
      $region11: #{tpu_custom_call.1} parent=5 // pred_region
        %s79 = ssub.s32 %s13, 1
      $region12: #{tpu_custom_call.1} parent=5 // pred_fallthru
        _
      %p80 = scmp.lt.s32.totalorder %s13, 3
      // Predicated region
      $region13: #{tpu_custom_call.1} parent=5 // pred_check
        %p81 = pneg %p80
      $region14: #{tpu_custom_call.1} parent=5 // pred_check_branch
        %83 = sbr.rel (%p81) target = $region16
      $region15: #{tpu_custom_call.1} parent=5 // pred_region
        // Predicated region
        $region17: #{tpu_custom_call.1} parent=15 // pred_check
          %p84 = pneg %p33
        $region18: #{tpu_custom_call.1} parent=15 // pred_check_branch
          %86 = sbr.rel (%p84) target = $region20
        $region19: #{tpu_custom_call.1} parent=15 // pred_region
          %s87 = sand.u32 %s23, 1
          %s88 = scalar_lea.sflag [#allocation3], %s87
          %s89 = sand.u32 %s23, 1
          %s90 = smul.addr %s89, 8
          %s91 = scalar_lea.vmem [#allocation2], %s90
          %93 = vsyncadd %s88, 0
          %s94 = smul.addr %s13, 8
          %s95 = scalar_lea.hbm %s0, %s94
          %s97 = sshll.u32 %s95, 4
          %s98 = int_to_ptr.hbm [resolvable:$true] %s97
          %s99 = sshll.u32 %s91, 4
          %s100 = int_to_ptr.vmem [resolvable:$true] %s99
          %102 = dma.hbm_to_vmem [thread:$0]  %s98, 128, %s100, %s88
        $region20: #{tpu_custom_call.1} parent=15 // pred_fallthru
          _
      $region16: #{tpu_custom_call.1} parent=5 // pred_fallthru
        _
      %p103 = scmp.le.s32.totalorder 1, %s13
      %p104 = scmp.lt.s32.totalorder %s13, 4
      %p105 = pnand %p103, %p104
      %p106 = pneg %p105
      // Predicated region
      $region21: #{tpu_custom_call.1} parent=5 // pred_check
        _
      $region22: #{tpu_custom_call.1} parent=5 // pred_check_branch
        %108 = sbr.rel (%p105) target = $region24
      $region23: #{tpu_custom_call.1} parent=5 // pred_region
        %s109 = ssub.s32 %s13, 1
        %s110 = sand.u32 %s26, 1
        %s111 = scalar_lea.sflag [#allocation3], %s110
        %s112 = sand.u32 %s26, 1
        %s113 = smul.addr %s112, 8
        %s114 = scalar_lea.vmem [#allocation2], %s113
        // Predicated region
        $region25: #{tpu_custom_call.1} parent=23 // pred_check
          %p115 = pneg %p39
        $region26: #{tpu_custom_call.1} parent=23 // pred_check_branch
          %117 = sbr.rel (%p115) target = $region28
        $region27: #{tpu_custom_call.1} parent=23 // pred_region
          %119 = dma.done %s111, 128
        $region28: #{tpu_custom_call.1} parent=23 // pred_fallthru
          _
        %s120 = sand.u32 %s26, 1
        %s121 = scalar_lea.sflag [#allocation3], %s120
        %s122 = sand.u32 %s26, 1
        %s123 = smul.addr %s122, 8
        %s124 = scalar_lea.vmem [#allocation2], %s123
        %p125 = pneg %p39
        %p126 = pneg %p36
        %p127 = pneg %p65
        %p128 = pneg %p62
        %s129 = sand.u32 %s52, 1
        %s130 = scalar_lea.sflag [#allocation4], %s129
        %s131 = sand.u32 %s52, 1
        %s132 = smul.addr %s131, 168
        %s133 = scalar_lea.vmem [#allocation5], %s132
        %v134 = vld [vmem:[%s114] sm:$0xff]
        %135 = vst [vmem:[%s133] sm:$0xff] %v134
        %v136 = vand.u32 2147483647, %v134
        %vm137 = vcmp.le.f32.partialorder %v136, 0.7853982
        %vm138 = vcmp.lt.s32.totalorder %v134, 0
        %v139 = vand.u32 %v134, 2139095040
        %v140 = vshrl.u32 %v139, 23
        %v141 = vsub.s32 %v140, 127
        %v142 = vand.u32 2147483647, %v134
        %v143 = vand.u32 %v142, 8388607
        %v144 = vor.u32 %v143, 8388608
        %v145 = vsub.s32 0, %v144
        %v146 = vadd.s32 %v141, 1
        %vm147 = vcmp.gt.s32.totalorder %v146, 0
        %v148 = vsel %vm147, %v146, 0
        %v149 = vshrl.u32 %v148, 5
        %v150 = vand.u32 %v148, 31
        %v151 = vsub.s32 32, %v150
        %v152 = vshrl.u32 683565275, %v151
        %v153 = vshll.u32 683565275, %v150
        %v154 = vshrl.u32 2475754826, %v151
        %v155 = vor.u32 %v153, %v154
        %v156 = vshll.u32 2475754826, %v150
        %v157 = vshrl.u32 2131351028, %v151
        %v158 = vor.u32 %v156, %v157
        %v159 = vshll.u32 2131351028, %v150
        %v160 = vshrl.u32 2102212464, %v151
        %v161 = vor.u32 %v159, %v160
        %v162 = vshll.u32 2102212464, %v150
        %v163 = vshrl.u32 920167782, %v151
        %v164 = vor.u32 %v162, %v163
        %v165 = vshll.u32 920167782, %v150
        %v166 = vshrl.u32 1326507024, %v151
        %v167 = vor.u32 %v165, %v166
        %vm168 = vcmp.lt.s32.totalorder %v149, 1
        %vm169 = vcmp.lt.s32.totalorder %v149, 2
        %vm170 = vcmp.lt.s32.totalorder %v149, 3
        %vm171 = vcmp.lt.s32.totalorder %v149, 4
        %v172 = vsel %vm168, %v152, %v155
        %v173 = vsel %vm171, %v161, 2102212464
        %v174 = vsel %vm170, %v158, %v173
        %v175 = vsel %vm169, %v172, %v174
        %v176 = vsel %vm168, %v155, %v158
        %v177 = vsel %vm171, %v164, 920167782
        %v178 = vsel %vm170, %v161, %v177
        %v179 = vsel %vm169, %v176, %v178
        %v180 = vsel %vm168, %v158, %v161
        %v181 = vsel %vm171, %v167, 1326507024
        %v182 = vsel %vm170, %v164, %v181
        %v183 = vsel %vm169, %v180, %v182
        %v184 = vshll.u32 %v144, 8
        %v185 = vand.u32 %v184, 65535
        %v186 = vshrl.u32 %v184, 16
        %v187 = vand.u32 %v183, 65535
        %v188 = vshrl.u32 %v183, 16
        %v189 = vmul.u32 %v185, %v187
        %v190 = vmul.u32 %v185, %v188
        %v191 = vmul.u32 %v186, %v187
        %v192 = vmul.u32 %v186, %v188
        %v193 = vshll.u32 %v190, 16
        %v194 = vshrl.u32 %v190, 16
        %v195 = vshll.u32 %v191, 16
        %v196 = vshrl.u32 %v191, 16
        %vm197 = vc.u32 %v189, %v193
        %v198 = vsel %vm197, 1, 0
        %v199 = vadd.s32 %v189, %v193
        %v200 = vadd.s32 %v192, %v198
        %vm201 = vc.u32 %v199, %v195
        %v202 = vsel %vm201, 1, 0
        %v203 = vadd.s32 %v199, %v195
        %v204 = vadd.s32 %v200, %v202
        %v205 = vadd.s32 %v204, %v194
        %v206 = vadd.s32 %v205, %v196
        %v207 = vand.u32 %v184, 65535
        %v208 = vshrl.u32 %v184, 16
        %v209 = vand.u32 %v179, 65535
        %v210 = vshrl.u32 %v179, 16
        %v211 = vmul.u32 %v207, %v209
        %v212 = vmul.u32 %v207, %v210
        %v213 = vmul.u32 %v208, %v209
        %v214 = vmul.u32 %v208, %v210
        %v215 = vshll.u32 %v212, 16
        %v216 = vshrl.u32 %v212, 16
        %v217 = vshll.u32 %v213, 16
        %v218 = vshrl.u32 %v213, 16
        %vm219 = vc.u32 %v211, %v215
        %v220 = vsel %vm219, 1, 0
        %v221 = vadd.s32 %v211, %v215
        %v222 = vadd.s32 %v214, %v220
        %vm223 = vc.u32 %v221, %v217
        %v224 = vsel %vm223, 1, 0
        %v225 = vadd.s32 %v221, %v217
        %v226 = vadd.s32 %v222, %v224
        %v227 = vadd.s32 %v226, %v216
        %v228 = vadd.s32 %v227, %v218
        %v229 = vmul.u32 %v184, %v175
        %v230 = vadd.s32 %v206, %v225
        %vm231 = vc.u32 %v206, %v225
        %v232 = vadd.s32 %v228, 1
        %v233 = vsel %vm231, %v232, %v228
        %v234 = vadd.s32 %v229, %v233
        %v235 = vadd.s32 %v234, 536870912
        %v236 = vshrl.u32 %v235, 30
        %v237 = vshll.u32 %v236, 30
        %v238 = vsub.s32 %v234, %v237
        %vm239 = vcmp.lt.s32.totalorder %v238, 0
        %v240 = vsub.s32 0, %v238
        %v241 = vsel %vm239, %v240, %v238
        %v242 = vclz %v241
        %v243 = vsub.s32 %v242, 2
        %vm244 = vcmp.gt.s32.totalorder 0, %v243
        %v245 = vsel %vm244, 0, %v243
        %v246 = vsub.s32 32, %v245
        %v247 = vshll.u32 %v238, %v245
        %v248 = vshrl.u32 %v230, %v246
        %v249 = vor.u32 %v247, %v248
        %v250 = vsub.s32 4294967266, %v245
        %v251 = vadd.s32 %v250, 127
        %v252 = vshll.u32 %v251, 23
        %v253 = vor.u32 4788187, %v252
        %v254 = vand.u32 2147483647, %v253
        %v256 = vcvt.s32.f32 %v249
        %v257 = vmul.f32 %v256, %v254
        %v258 = vxor.u32 %v257, 2147483648
        %v259 = vsel %vm138, %v258, %v257
        %v260 = vsub.s32 4, %v236
        %v261 = vsel %vm138, %v260, %v236
        %v262 = vsel %vm137, %v134, %v259
        %v263 = vsel %vm137, 0, %v261
        %v264 = vmul.f32 %v262, %v262
        %v265 = vmul.f32 %v264, -0.001358992
        %v266 = vadd.f32 %v265, 0.041655596
        %v267 = vmul.f32 %v264, %v266
        %v268 = vadd.f32 %v267, -0.4999988
        %v269 = vmul.f32 %v264, %v268
        %v270 = vadd.f32 1.0, %v269
        %v271 = vmul.f32 %v262, %v262
        %v272 = vmul.f32 %v271, -0.00019511016
        %v273 = vadd.f32 %v272, 0.008332121
        %v274 = vmul.f32 %v271, %v273
        %v275 = vadd.f32 %v274, -0.16666654
        %v276 = vmul.f32 %v271, %v275
        %v277 = vadd.f32 %v276, 1.0
        %v278 = vmul.f32 %v277, %v262
        %vm279 = vweird.f32 %v134
        %v280 = vadd.s32 %v263, 3
        %v281 = vand.u32 %v280, 3
        %vm282 = vcmp.lt.s32.totalorder %v281, 2
        %vm283 = vcmp.eq.s32.totalorder %v281, 0
        %v284 = vxor.u32 %v278, 2147483648
        %v285 = vsel %vm283, %v270, %v284
        %vm286 = vcmp.eq.s32.totalorder %v281, 2
        %v287 = vxor.u32 %v270, 2147483648
        %v288 = vsel %vm286, %v287, %v278
        %v289 = vsel %vm282, %v285, %v288
        %v290 = vsel %vm279, nan, %v289
        %v291 = vand.u32 2147483647, %v134
        %vm292 = vcmp.le.f32.partialorder %v291, 0.7853982
        %vm293 = vcmp.lt.s32.totalorder %v134, 0
        %v294 = vand.u32 %v134, 2139095040
        %v295 = vshrl.u32 %v294, 23
        %v296 = vsub.s32 %v295, 127
        %v297 = vand.u32 2147483647, %v134
        %v298 = vand.u32 %v297, 8388607
        %v299 = vor.u32 %v298, 8388608
        %v300 = vsub.s32 0, %v299
        %v301 = vadd.s32 %v296, 1
        %vm302 = vcmp.gt.s32.totalorder %v301, 0
        %v303 = vsel %vm302, %v301, 0
        %v304 = vshrl.u32 %v303, 5
        %v305 = vand.u32 %v303, 31
        %v306 = vsub.s32 32, %v305
        %v307 = vshrl.u32 683565275, %v306
        %v308 = vshll.u32 683565275, %v305
        %v309 = vshrl.u32 2475754826, %v306
        %v310 = vor.u32 %v308, %v309
        %v311 = vshll.u32 2475754826, %v305
        %v312 = vshrl.u32 2131351028, %v306
        %v313 = vor.u32 %v311, %v312
        %v314 = vshll.u32 2131351028, %v305
        %v315 = vshrl.u32 2102212464, %v306
        %v316 = vor.u32 %v314, %v315
        %v317 = vshll.u32 2102212464, %v305
        %v318 = vshrl.u32 920167782, %v306
        %v319 = vor.u32 %v317, %v318
        %v320 = vshll.u32 920167782, %v305
        %v321 = vshrl.u32 1326507024, %v306
        %v322 = vor.u32 %v320, %v321
        %vm323 = vcmp.lt.s32.totalorder %v304, 1
        %vm324 = vcmp.lt.s32.totalorder %v304, 2
        %vm325 = vcmp.lt.s32.totalorder %v304, 3
        %vm326 = vcmp.lt.s32.totalorder %v304, 4
        %v327 = vsel %vm323, %v307, %v310
        %v328 = vsel %vm326, %v316, 2102212464
        %v329 = vsel %vm325, %v313, %v328
        %v330 = vsel %vm324, %v327, %v329
        %v331 = vsel %vm323, %v310, %v313
        %v332 = vsel %vm326, %v319, 920167782
        %v333 = vsel %vm325, %v316, %v332
        %v334 = vsel %vm324, %v331, %v333
        %v335 = vsel %vm323, %v313, %v316
        %v336 = vsel %vm326, %v322, 1326507024
        %v337 = vsel %vm325, %v319, %v336
        %v338 = vsel %vm324, %v335, %v337
        %v339 = vshll.u32 %v299, 8
        %v340 = vand.u32 %v339, 65535
        %v341 = vshrl.u32 %v339, 16
        %v342 = vand.u32 %v338, 65535
        %v343 = vshrl.u32 %v338, 16
        %v344 = vmul.u32 %v340, %v342
        %v345 = vmul.u32 %v340, %v343
        %v346 = vmul.u32 %v341, %v342
        %v347 = vmul.u32 %v341, %v343
        %v348 = vshll.u32 %v345, 16
        %v349 = vshrl.u32 %v345, 16
        %v350 = vshll.u32 %v346, 16
        %v351 = vshrl.u32 %v346, 16
        %vm352 = vc.u32 %v344, %v348
        %v353 = vsel %vm352, 1, 0
        %v354 = vadd.s32 %v344, %v348
        %v355 = vadd.s32 %v347, %v353
        %vm356 = vc.u32 %v354, %v350
        %v357 = vsel %vm356, 1, 0
        %v358 = vadd.s32 %v354, %v350
        %v359 = vadd.s32 %v355, %v357
        %v360 = vadd.s32 %v359, %v349
        %v361 = vadd.s32 %v360, %v351
        %v362 = vand.u32 %v339, 65535
        %v363 = vshrl.u32 %v339, 16
        %v364 = vand.u32 %v334, 65535
        %v365 = vshrl.u32 %v334, 16
        %v366 = vmul.u32 %v362, %v364
        %v367 = vmul.u32 %v362, %v365
        %v368 = vmul.u32 %v363, %v364
        %v369 = vmul.u32 %v363, %v365
        %v370 = vshll.u32 %v367, 16
        %v371 = vshrl.u32 %v367, 16
        %v372 = vshll.u32 %v368, 16
        %v373 = vshrl.u32 %v368, 16
        %vm374 = vc.u32 %v366, %v370
        %v375 = vsel %vm374, 1, 0
        %v376 = vadd.s32 %v366, %v370
        %v377 = vadd.s32 %v369, %v375
        %vm378 = vc.u32 %v376, %v372
        %v379 = vsel %vm378, 1, 0
        %v380 = vadd.s32 %v376, %v372
        %v381 = vadd.s32 %v377, %v379
        %v382 = vadd.s32 %v381, %v371
        %v383 = vadd.s32 %v382, %v373
        %v384 = vmul.u32 %v339, %v330
        %v385 = vadd.s32 %v361, %v380
        %vm386 = vc.u32 %v361, %v380
        %v387 = vadd.s32 %v383, 1
        %v388 = vsel %vm386, %v387, %v383
        %v389 = vadd.s32 %v384, %v388
        %v390 = vadd.s32 %v389, 536870912
        %v391 = vshrl.u32 %v390, 30
        %v392 = vshll.u32 %v391, 30
        %v393 = vsub.s32 %v389, %v392
        %vm394 = vcmp.lt.s32.totalorder %v393, 0
        %v395 = vsub.s32 0, %v393
        %v396 = vsel %vm394, %v395, %v393
        %v397 = vclz %v396
        %v398 = vsub.s32 %v397, 2
        %vm399 = vcmp.gt.s32.totalorder 0, %v398
        %v400 = vsel %vm399, 0, %v398
        %v401 = vsub.s32 32, %v400
        %v402 = vshll.u32 %v393, %v400
        %v403 = vshrl.u32 %v385, %v401
        %v404 = vor.u32 %v402, %v403
        %v405 = vsub.s32 4294967266, %v400
        %v406 = vadd.s32 %v405, 127
        %v407 = vshll.u32 %v406, 23
        %v408 = vor.u32 4788187, %v407
        %v409 = vand.u32 2147483647, %v408
        %v411 = vcvt.s32.f32 %v404
        %v412 = vmul.f32 %v411, %v409
        %v413 = vxor.u32 %v412, 2147483648
        %v414 = vsel %vm293, %v413, %v412
        %v415 = vsub.s32 4, %v391
        %v416 = vsel %vm293, %v415, %v391
        %v417 = vsel %vm292, %v134, %v414
        %v418 = vsel %vm292, 0, %v416
        %v419 = vmul.f32 %v417, %v417
        %v420 = vmul.f32 %v419, -0.001358992
        %v421 = vadd.f32 %v420, 0.041655596
        %v422 = vmul.f32 %v419, %v421
        %v423 = vadd.f32 %v422, -0.4999988
        %v424 = vmul.f32 %v419, %v423
        %v425 = vadd.f32 1.0, %v424
        %v426 = vmul.f32 %v417, %v417
        %v427 = vmul.f32 %v426, -0.00019511016
        %v428 = vadd.f32 %v427, 0.008332121
        %v429 = vmul.f32 %v426, %v428
        %v430 = vadd.f32 %v429, -0.16666654
        %v431 = vmul.f32 %v426, %v430
        %v432 = vadd.f32 %v431, 1.0
        %v433 = vmul.f32 %v432, %v417
        %vm434 = vweird.f32 %v134
        %v435 = vand.u32 %v418, 3
        %vm436 = vcmp.lt.s32.totalorder %v435, 2
        %vm437 = vcmp.eq.s32.totalorder %v435, 0
        %v438 = vxor.u32 %v433, 2147483648
        %v439 = vsel %vm437, %v425, %v438
        %vm440 = vcmp.eq.s32.totalorder %v435, 2
        %v441 = vxor.u32 %v425, 2147483648
        %v442 = vsel %vm440, %v441, %v433
        %v443 = vsel %vm436, %v439, %v442
        %v444 = vsel %vm434, nan, %v443
        %s445 = scalar_lea.vmem %s133, 8 [#allocation5]
        %446 = vst [vmem:[%s445] sm:$0xff] %v290
        %s447 = scalar_lea.vmem %s133, 16 [#allocation5]
        %448 = vst [vmem:[%s447] sm:$0xff] %v444
        %v449 = vmul.f32 %v290, 2.0
        %v450 = vmul.f32 %v449, %v444
        %v451 = vmul.f32 %v449, %v290
        %v452 = vsub.f32 1.0, %v451
        %s453 = scalar_lea.vmem %s133, 24 [#allocation5]
        %454 = vst [vmem:[%s453] sm:$0xff] %v450
        %s455 = scalar_lea.vmem %s133, 32 [#allocation5]
        %456 = vst [vmem:[%s455] sm:$0xff] %v452
        %v457 = vmul.f32 %v450, 2.0
        %v458 = vmul.f32 %v457, %v452
        %v459 = vmul.f32 %v457, %v450
        %v460 = vsub.f32 1.0, %v459
        %s461 = scalar_lea.vmem %s133, 40 [#allocation5]
        %462 = vst [vmem:[%s461] sm:$0xff] %v458
        %s463 = scalar_lea.vmem %s133, 48 [#allocation5]
        %464 = vst [vmem:[%s463] sm:$0xff] %v460
        %v465 = vmul.f32 %v458, 2.0
        %v466 = vmul.f32 %v465, %v460
        %v467 = vmul.f32 %v465, %v458
        %v468 = vsub.f32 1.0, %v467
        %s469 = scalar_lea.vmem %s133, 56 [#allocation5]
        %470 = vst [vmem:[%s469] sm:$0xff] %v466
        %s471 = scalar_lea.vmem %s133, 64 [#allocation5]
        %472 = vst [vmem:[%s471] sm:$0xff] %v468
        %v473 = vmul.f32 %v134, 16.0
        %v474 = vand.u32 2147483647, %v473
        %vm475 = vcmp.le.f32.partialorder %v474, 0.7853982
        %vm476 = vcmp.lt.s32.totalorder %v473, 0
        %v477 = vand.u32 %v473, 2139095040
        %v478 = vshrl.u32 %v477, 23
        %v479 = vsub.s32 %v478, 127
        %v480 = vand.u32 2147483647, %v473
        %v481 = vand.u32 %v480, 8388607
        %v482 = vor.u32 %v481, 8388608
        %v483 = vsub.s32 0, %v482
        %v484 = vadd.s32 %v479, 1
        %vm485 = vcmp.gt.s32.totalorder %v484, 0
        %v486 = vsel %vm485, %v484, 0
        %v487 = vshrl.u32 %v486, 5
        %v488 = vand.u32 %v486, 31
        %v489 = vsub.s32 32, %v488
        %v490 = vshrl.u32 683565275, %v489
        %v491 = vshll.u32 683565275, %v488
        %v492 = vshrl.u32 2475754826, %v489
        %v493 = vor.u32 %v491, %v492
        %v494 = vshll.u32 2475754826, %v488
        %v495 = vshrl.u32 2131351028, %v489
        %v496 = vor.u32 %v494, %v495
        %v497 = vshll.u32 2131351028, %v488
        %v498 = vshrl.u32 2102212464, %v489
        %v499 = vor.u32 %v497, %v498
        %v500 = vshll.u32 2102212464, %v488
        %v501 = vshrl.u32 920167782, %v489
        %v502 = vor.u32 %v500, %v501
        %v503 = vshll.u32 920167782, %v488
        %v504 = vshrl.u32 1326507024, %v489
        %v505 = vor.u32 %v503, %v504
        %vm506 = vcmp.lt.s32.totalorder %v487, 1
        %vm507 = vcmp.lt.s32.totalorder %v487, 2
        %vm508 = vcmp.lt.s32.totalorder %v487, 3
        %vm509 = vcmp.lt.s32.totalorder %v487, 4
        %v510 = vsel %vm506, %v490, %v493
        %v511 = vsel %vm509, %v499, 2102212464
        %v512 = vsel %vm508, %v496, %v511
        %v513 = vsel %vm507, %v510, %v512
        %v514 = vsel %vm506, %v493, %v496
        %v515 = vsel %vm509, %v502, 920167782
        %v516 = vsel %vm508, %v499, %v515
        %v517 = vsel %vm507, %v514, %v516
        %v518 = vsel %vm506, %v496, %v499
        %v519 = vsel %vm509, %v505, 1326507024
        %v520 = vsel %vm508, %v502, %v519
        %v521 = vsel %vm507, %v518, %v520
        %v522 = vshll.u32 %v482, 8
        %v523 = vand.u32 %v522, 65535
        %v524 = vshrl.u32 %v522, 16
        %v525 = vand.u32 %v521, 65535
        %v526 = vshrl.u32 %v521, 16
        %v527 = vmul.u32 %v523, %v525
        %v528 = vmul.u32 %v523, %v526
        %v529 = vmul.u32 %v524, %v525
        %v530 = vmul.u32 %v524, %v526
        %v531 = vshll.u32 %v528, 16
        %v532 = vshrl.u32 %v528, 16
        %v533 = vshll.u32 %v529, 16
        %v534 = vshrl.u32 %v529, 16
        %vm535 = vc.u32 %v527, %v531
        %v536 = vsel %vm535, 1, 0
        %v537 = vadd.s32 %v527, %v531
        %v538 = vadd.s32 %v530, %v536
        %vm539 = vc.u32 %v537, %v533
        %v540 = vsel %vm539, 1, 0
        %v541 = vadd.s32 %v537, %v533
        %v542 = vadd.s32 %v538, %v540
        %v543 = vadd.s32 %v542, %v532
        %v544 = vadd.s32 %v543, %v534
        %v545 = vand.u32 %v522, 65535
        %v546 = vshrl.u32 %v522, 16
        %v547 = vand.u32 %v517, 65535
        %v548 = vshrl.u32 %v517, 16
        %v549 = vmul.u32 %v545, %v547
        %v550 = vmul.u32 %v545, %v548
        %v551 = vmul.u32 %v546, %v547
        %v552 = vmul.u32 %v546, %v548
        %v553 = vshll.u32 %v550, 16
        %v554 = vshrl.u32 %v550, 16
        %v555 = vshll.u32 %v551, 16
        %v556 = vshrl.u32 %v551, 16
        %vm557 = vc.u32 %v549, %v553
        %v558 = vsel %vm557, 1, 0
        %v559 = vadd.s32 %v549, %v553
        %v560 = vadd.s32 %v552, %v558
        %vm561 = vc.u32 %v559, %v555
        %v562 = vsel %vm561, 1, 0
        %v563 = vadd.s32 %v559, %v555
        %v564 = vadd.s32 %v560, %v562
        %v565 = vadd.s32 %v564, %v554
        %v566 = vadd.s32 %v565, %v556
        %v567 = vmul.u32 %v522, %v513
        %v568 = vadd.s32 %v544, %v563
        %vm569 = vc.u32 %v544, %v563
        %v570 = vadd.s32 %v566, 1
        %v571 = vsel %vm569, %v570, %v566
        %v572 = vadd.s32 %v567, %v571
        %v573 = vadd.s32 %v572, 536870912
        %v574 = vshrl.u32 %v573, 30
        %v575 = vshll.u32 %v574, 30
        %v576 = vsub.s32 %v572, %v575
        %vm577 = vcmp.lt.s32.totalorder %v576, 0
        %v578 = vsub.s32 0, %v576
        %v579 = vsel %vm577, %v578, %v576
        %v580 = vclz %v579
        %v581 = vsub.s32 %v580, 2
        %vm582 = vcmp.gt.s32.totalorder 0, %v581
        %v583 = vsel %vm582, 0, %v581
        %v584 = vsub.s32 32, %v583
        %v585 = vshll.u32 %v576, %v583
        %v586 = vshrl.u32 %v568, %v584
        %v587 = vor.u32 %v585, %v586
        %v588 = vsub.s32 4294967266, %v583
        %v589 = vadd.s32 %v588, 127
        %v590 = vshll.u32 %v589, 23
        %v591 = vor.u32 4788187, %v590
        %v592 = vand.u32 2147483647, %v591
        %v594 = vcvt.s32.f32 %v587
        %v595 = vmul.f32 %v594, %v592
        %v596 = vxor.u32 %v595, 2147483648
        %v597 = vsel %vm476, %v596, %v595
        %v598 = vsub.s32 4, %v574
        %v599 = vsel %vm476, %v598, %v574
        %v600 = vsel %vm475, %v473, %v597
        %v601 = vsel %vm475, 0, %v599
        %v602 = vmul.f32 %v600, %v600
        %v603 = vmul.f32 %v602, -0.001358992
        %v604 = vadd.f32 %v603, 0.041655596
        %v605 = vmul.f32 %v602, %v604
        %v606 = vadd.f32 %v605, -0.4999988
        %v607 = vmul.f32 %v602, %v606
        %v608 = vadd.f32 1.0, %v607
        %v609 = vmul.f32 %v600, %v600
        %v610 = vmul.f32 %v609, -0.00019511016
        %v611 = vadd.f32 %v610, 0.008332121
        %v612 = vmul.f32 %v609, %v611
        %v613 = vadd.f32 %v612, -0.16666654
        %v614 = vmul.f32 %v609, %v613
        %v615 = vadd.f32 %v614, 1.0
        %v616 = vmul.f32 %v615, %v600
        %vm617 = vweird.f32 %v473
        %v618 = vadd.s32 %v601, 3
        %v619 = vand.u32 %v618, 3
        %vm620 = vcmp.lt.s32.totalorder %v619, 2
        %vm621 = vcmp.eq.s32.totalorder %v619, 0
        %v622 = vxor.u32 %v616, 2147483648
        %v623 = vsel %vm621, %v608, %v622
        %vm624 = vcmp.eq.s32.totalorder %v619, 2
        %v625 = vxor.u32 %v608, 2147483648
        %v626 = vsel %vm624, %v625, %v616
        %v627 = vsel %vm620, %v623, %v626
        %v628 = vsel %vm617, nan, %v627
        %v629 = vand.u32 2147483647, %v473
        %vm630 = vcmp.le.f32.partialorder %v629, 0.7853982
        %vm631 = vcmp.lt.s32.totalorder %v473, 0
        %v632 = vand.u32 %v473, 2139095040
        %v633 = vshrl.u32 %v632, 23
        %v634 = vsub.s32 %v633, 127
        %v635 = vand.u32 2147483647, %v473
        %v636 = vand.u32 %v635, 8388607
        %v637 = vor.u32 %v636, 8388608
        %v638 = vsub.s32 0, %v637
        %v639 = vadd.s32 %v634, 1
        %vm640 = vcmp.gt.s32.totalorder %v639, 0
        %v641 = vsel %vm640, %v639, 0
        %v642 = vshrl.u32 %v641, 5
        %v643 = vand.u32 %v641, 31
        %v644 = vsub.s32 32, %v643
        %v645 = vshrl.u32 683565275, %v644
        %v646 = vshll.u32 683565275, %v643
        %v647 = vshrl.u32 2475754826, %v644
        %v648 = vor.u32 %v646, %v647
        %v649 = vshll.u32 2475754826, %v643
        %v650 = vshrl.u32 2131351028, %v644
        %v651 = vor.u32 %v649, %v650
        %v652 = vshll.u32 2131351028, %v643
        %v653 = vshrl.u32 2102212464, %v644
        %v654 = vor.u32 %v652, %v653
        %v655 = vshll.u32 2102212464, %v643
        %v656 = vshrl.u32 920167782, %v644
        %v657 = vor.u32 %v655, %v656
        %v658 = vshll.u32 920167782, %v643
        %v659 = vshrl.u32 1326507024, %v644
        %v660 = vor.u32 %v658, %v659
        %vm661 = vcmp.lt.s32.totalorder %v642, 1
        %vm662 = vcmp.lt.s32.totalorder %v642, 2
        %vm663 = vcmp.lt.s32.totalorder %v642, 3
        %vm664 = vcmp.lt.s32.totalorder %v642, 4
        %v665 = vsel %vm661, %v645, %v648
        %v666 = vsel %vm664, %v654, 2102212464
        %v667 = vsel %vm663, %v651, %v666
        %v668 = vsel %vm662, %v665, %v667
        %v669 = vsel %vm661, %v648, %v651
        %v670 = vsel %vm664, %v657, 920167782
        %v671 = vsel %vm663, %v654, %v670
        %v672 = vsel %vm662, %v669, %v671
        %v673 = vsel %vm661, %v651, %v654
        %v674 = vsel %vm664, %v660, 1326507024
        %v675 = vsel %vm663, %v657, %v674
        %v676 = vsel %vm662, %v673, %v675
        %v677 = vshll.u32 %v637, 8
        %v678 = vand.u32 %v677, 65535
        %v679 = vshrl.u32 %v677, 16
        %v680 = vand.u32 %v676, 65535
        %v681 = vshrl.u32 %v676, 16
        %v682 = vmul.u32 %v678, %v680
        %v683 = vmul.u32 %v678, %v681
        %v684 = vmul.u32 %v679, %v680
        %v685 = vmul.u32 %v679, %v681
        %v686 = vshll.u32 %v683, 16
        %v687 = vshrl.u32 %v683, 16
        %v688 = vshll.u32 %v684, 16
        %v689 = vshrl.u32 %v684, 16
        %vm690 = vc.u32 %v682, %v686
        %v691 = vsel %vm690, 1, 0
        %v692 = vadd.s32 %v682, %v686
        %v693 = vadd.s32 %v685, %v691
        %vm694 = vc.u32 %v692, %v688
        %v695 = vsel %vm694, 1, 0
        %v696 = vadd.s32 %v692, %v688
        %v697 = vadd.s32 %v693, %v695
        %v698 = vadd.s32 %v697, %v687
        %v699 = vadd.s32 %v698, %v689
        %v700 = vand.u32 %v677, 65535
        %v701 = vshrl.u32 %v677, 16
        %v702 = vand.u32 %v672, 65535
        %v703 = vshrl.u32 %v672, 16
        %v704 = vmul.u32 %v700, %v702
        %v705 = vmul.u32 %v700, %v703
        %v706 = vmul.u32 %v701, %v702
        %v707 = vmul.u32 %v701, %v703
        %v708 = vshll.u32 %v705, 16
        %v709 = vshrl.u32 %v705, 16
        %v710 = vshll.u32 %v706, 16
        %v711 = vshrl.u32 %v706, 16
        %vm712 = vc.u32 %v704, %v708
        %v713 = vsel %vm712, 1, 0
        %v714 = vadd.s32 %v704, %v708
        %v715 = vadd.s32 %v707, %v713
        %vm716 = vc.u32 %v714, %v710
        %v717 = vsel %vm716, 1, 0
        %v718 = vadd.s32 %v714, %v710
        %v719 = vadd.s32 %v715, %v717
        %v720 = vadd.s32 %v719, %v709
        %v721 = vadd.s32 %v720, %v711
        %v722 = vmul.u32 %v677, %v668
        %v723 = vadd.s32 %v699, %v718
        %vm724 = vc.u32 %v699, %v718
        %v725 = vadd.s32 %v721, 1
        %v726 = vsel %vm724, %v725, %v721
        %v727 = vadd.s32 %v722, %v726
        %v728 = vadd.s32 %v727, 536870912
        %v729 = vshrl.u32 %v728, 30
        %v730 = vshll.u32 %v729, 30
        %v731 = vsub.s32 %v727, %v730
        %vm732 = vcmp.lt.s32.totalorder %v731, 0
        %v733 = vsub.s32 0, %v731
        %v734 = vsel %vm732, %v733, %v731
        %v735 = vclz %v734
        %v736 = vsub.s32 %v735, 2
        %vm737 = vcmp.gt.s32.totalorder 0, %v736
        %v738 = vsel %vm737, 0, %v736
        %v739 = vsub.s32 32, %v738
        %v740 = vshll.u32 %v731, %v738
        %v741 = vshrl.u32 %v723, %v739
        %v742 = vor.u32 %v740, %v741
        %v743 = vsub.s32 4294967266, %v738
        %v744 = vadd.s32 %v743, 127
        %v745 = vshll.u32 %v744, 23
        %v746 = vor.u32 4788187, %v745
        %v747 = vand.u32 2147483647, %v746
        %v749 = vcvt.s32.f32 %v742
        %v750 = vmul.f32 %v749, %v747
        %v751 = vxor.u32 %v750, 2147483648
        %v752 = vsel %vm631, %v751, %v750
        %v753 = vsub.s32 4, %v729
        %v754 = vsel %vm631, %v753, %v729
        %v755 = vsel %vm630, %v473, %v752
        %v756 = vsel %vm630, 0, %v754
        %v757 = vmul.f32 %v755, %v755
        %v758 = vmul.f32 %v757, -0.001358992
        %v759 = vadd.f32 %v758, 0.041655596
        %v760 = vmul.f32 %v757, %v759
        %v761 = vadd.f32 %v760, -0.4999988
        %v762 = vmul.f32 %v757, %v761
        %v763 = vadd.f32 1.0, %v762
        %v764 = vmul.f32 %v755, %v755
        %v765 = vmul.f32 %v764, -0.00019511016
        %v766 = vadd.f32 %v765, 0.008332121
        %v767 = vmul.f32 %v764, %v766
        %v768 = vadd.f32 %v767, -0.16666654
        %v769 = vmul.f32 %v764, %v768
        %v770 = vadd.f32 %v769, 1.0
        %v771 = vmul.f32 %v770, %v755
        %vm772 = vweird.f32 %v473
        %v773 = vand.u32 %v756, 3
        %vm774 = vcmp.lt.s32.totalorder %v773, 2
        %vm775 = vcmp.eq.s32.totalorder %v773, 0
        %v776 = vxor.u32 %v771, 2147483648
        %v777 = vsel %vm775, %v763, %v776
        %vm778 = vcmp.eq.s32.totalorder %v773, 2
        %v779 = vxor.u32 %v763, 2147483648
        %v780 = vsel %vm778, %v779, %v771
        %v781 = vsel %vm774, %v777, %v780
        %v782 = vsel %vm772, nan, %v781
        %s783 = scalar_lea.vmem %s133, 72 [#allocation5]
        %784 = vst [vmem:[%s783] sm:$0xff] %v628
        %s785 = scalar_lea.vmem %s133, 80 [#allocation5]
        %786 = vst [vmem:[%s785] sm:$0xff] %v782
        %v787 = vmul.f32 %v628, 2.0
        %v788 = vmul.f32 %v787, %v782
        %v789 = vmul.f32 %v787, %v628
        %v790 = vsub.f32 1.0, %v789
        %s791 = scalar_lea.vmem %s133, 88 [#allocation5]
        %792 = vst [vmem:[%s791] sm:$0xff] %v788
        %s793 = scalar_lea.vmem %s133, 96 [#allocation5]
        %794 = vst [vmem:[%s793] sm:$0xff] %v790
        %v795 = vmul.f32 %v788, 2.0
        %v796 = vmul.f32 %v795, %v790
        %v797 = vmul.f32 %v795, %v788
        %v798 = vsub.f32 1.0, %v797
        %s799 = scalar_lea.vmem %s133, 104 [#allocation5]
        %800 = vst [vmem:[%s799] sm:$0xff] %v796
        %s801 = scalar_lea.vmem %s133, 112 [#allocation5]
        %802 = vst [vmem:[%s801] sm:$0xff] %v798
        %v803 = vmul.f32 %v796, 2.0
        %v804 = vmul.f32 %v803, %v798
        %v805 = vmul.f32 %v803, %v796
        %v806 = vsub.f32 1.0, %v805
        %s807 = scalar_lea.vmem %s133, 120 [#allocation5]
        %808 = vst [vmem:[%s807] sm:$0xff] %v804
        %s809 = scalar_lea.vmem %s133, 128 [#allocation5]
        %810 = vst [vmem:[%s809] sm:$0xff] %v806
        %v811 = vmul.f32 %v134, 256.0
        %v812 = vand.u32 2147483647, %v811
        %vm813 = vcmp.le.f32.partialorder %v812, 0.7853982
        %vm814 = vcmp.lt.s32.totalorder %v811, 0
        %v815 = vand.u32 %v811, 2139095040
        %v816 = vshrl.u32 %v815, 23
        %v817 = vsub.s32 %v816, 127
        %v818 = vand.u32 2147483647, %v811
        %v819 = vand.u32 %v818, 8388607
        %v820 = vor.u32 %v819, 8388608
        %v821 = vsub.s32 0, %v820
        %v822 = vadd.s32 %v817, 1
        %vm823 = vcmp.gt.s32.totalorder %v822, 0
        %v824 = vsel %vm823, %v822, 0
        %v825 = vshrl.u32 %v824, 5
        %v826 = vand.u32 %v824, 31
        %v827 = vsub.s32 32, %v826
        %v828 = vshrl.u32 683565275, %v827
        %v829 = vshll.u32 683565275, %v826
        %v830 = vshrl.u32 2475754826, %v827
        %v831 = vor.u32 %v829, %v830
        %v832 = vshll.u32 2475754826, %v826
        %v833 = vshrl.u32 2131351028, %v827
        %v834 = vor.u32 %v832, %v833
        %v835 = vshll.u32 2131351028, %v826
        %v836 = vshrl.u32 2102212464, %v827
        %v837 = vor.u32 %v835, %v836
        %v838 = vshll.u32 2102212464, %v826
        %v839 = vshrl.u32 920167782, %v827
        %v840 = vor.u32 %v838, %v839
        %v841 = vshll.u32 920167782, %v826
        %v842 = vshrl.u32 1326507024, %v827
        %v843 = vor.u32 %v841, %v842
        %vm844 = vcmp.lt.s32.totalorder %v825, 1
        %vm845 = vcmp.lt.s32.totalorder %v825, 2
        %vm846 = vcmp.lt.s32.totalorder %v825, 3
        %vm847 = vcmp.lt.s32.totalorder %v825, 4
        %v848 = vsel %vm844, %v828, %v831
        %v849 = vsel %vm847, %v837, 2102212464
        %v850 = vsel %vm846, %v834, %v849
        %v851 = vsel %vm845, %v848, %v850
        %v852 = vsel %vm844, %v831, %v834
        %v853 = vsel %vm847, %v840, 920167782
        %v854 = vsel %vm846, %v837, %v853
        %v855 = vsel %vm845, %v852, %v854
        %v856 = vsel %vm844, %v834, %v837
        %v857 = vsel %vm847, %v843, 1326507024
        %v858 = vsel %vm846, %v840, %v857
        %v859 = vsel %vm845, %v856, %v858
        %v860 = vshll.u32 %v820, 8
        %v861 = vand.u32 %v860, 65535
        %v862 = vshrl.u32 %v860, 16
        %v863 = vand.u32 %v859, 65535
        %v864 = vshrl.u32 %v859, 16
        %v865 = vmul.u32 %v861, %v863
        %v866 = vmul.u32 %v861, %v864
        %v867 = vmul.u32 %v862, %v863
        %v868 = vmul.u32 %v862, %v864
        %v869 = vshll.u32 %v866, 16
        %v870 = vshrl.u32 %v866, 16
        %v871 = vshll.u32 %v867, 16
        %v872 = vshrl.u32 %v867, 16
        %vm873 = vc.u32 %v865, %v869
        %v874 = vsel %vm873, 1, 0
        %v875 = vadd.s32 %v865, %v869
        %v876 = vadd.s32 %v868, %v874
        %vm877 = vc.u32 %v875, %v871
        %v878 = vsel %vm877, 1, 0
        %v879 = vadd.s32 %v875, %v871
        %v880 = vadd.s32 %v876, %v878
        %v881 = vadd.s32 %v880, %v870
        %v882 = vadd.s32 %v881, %v872
        %v883 = vand.u32 %v860, 65535
        %v884 = vshrl.u32 %v860, 16
        %v885 = vand.u32 %v855, 65535
        %v886 = vshrl.u32 %v855, 16
        %v887 = vmul.u32 %v883, %v885
        %v888 = vmul.u32 %v883, %v886
        %v889 = vmul.u32 %v884, %v885
        %v890 = vmul.u32 %v884, %v886
        %v891 = vshll.u32 %v888, 16
        %v892 = vshrl.u32 %v888, 16
        %v893 = vshll.u32 %v889, 16
        %v894 = vshrl.u32 %v889, 16
        %vm895 = vc.u32 %v887, %v891
        %v896 = vsel %vm895, 1, 0
        %v897 = vadd.s32 %v887, %v891
        %v898 = vadd.s32 %v890, %v896
        %vm899 = vc.u32 %v897, %v893
        %v900 = vsel %vm899, 1, 0
        %v901 = vadd.s32 %v897, %v893
        %v902 = vadd.s32 %v898, %v900
        %v903 = vadd.s32 %v902, %v892
        %v904 = vadd.s32 %v903, %v894
        %v905 = vmul.u32 %v860, %v851
        %v906 = vadd.s32 %v882, %v901
        %vm907 = vc.u32 %v882, %v901
        %v908 = vadd.s32 %v904, 1
        %v909 = vsel %vm907, %v908, %v904
        %v910 = vadd.s32 %v905, %v909
        %v911 = vadd.s32 %v910, 536870912
        %v912 = vshrl.u32 %v911, 30
        %v913 = vshll.u32 %v912, 30
        %v914 = vsub.s32 %v910, %v913
        %vm915 = vcmp.lt.s32.totalorder %v914, 0
        %v916 = vsub.s32 0, %v914
        %v917 = vsel %vm915, %v916, %v914
        %v918 = vclz %v917
        %v919 = vsub.s32 %v918, 2
        %vm920 = vcmp.gt.s32.totalorder 0, %v919
        %v921 = vsel %vm920, 0, %v919
        %v922 = vsub.s32 32, %v921
        %v923 = vshll.u32 %v914, %v921
        %v924 = vshrl.u32 %v906, %v922
        %v925 = vor.u32 %v923, %v924
        %v926 = vsub.s32 4294967266, %v921
        %v927 = vadd.s32 %v926, 127
        %v928 = vshll.u32 %v927, 23
        %v929 = vor.u32 4788187, %v928
        %v930 = vand.u32 2147483647, %v929
        %v932 = vcvt.s32.f32 %v925
        %v933 = vmul.f32 %v932, %v930
        %v934 = vxor.u32 %v933, 2147483648
        %v935 = vsel %vm814, %v934, %v933
        %v936 = vsub.s32 4, %v912
        %v937 = vsel %vm814, %v936, %v912
        %v938 = vsel %vm813, %v811, %v935
        %v939 = vsel %vm813, 0, %v937
        %v940 = vmul.f32 %v938, %v938
        %v941 = vmul.f32 %v940, -0.001358992
        %v942 = vadd.f32 %v941, 0.041655596
        %v943 = vmul.f32 %v940, %v942
        %v944 = vadd.f32 %v943, -0.4999988
        %v945 = vmul.f32 %v940, %v944
        %v946 = vadd.f32 1.0, %v945
        %v947 = vmul.f32 %v938, %v938
        %v948 = vmul.f32 %v947, -0.00019511016
        %v949 = vadd.f32 %v948, 0.008332121
        %v950 = vmul.f32 %v947, %v949
        %v951 = vadd.f32 %v950, -0.16666654
        %v952 = vmul.f32 %v947, %v951
        %v953 = vadd.f32 %v952, 1.0
        %v954 = vmul.f32 %v953, %v938
        %vm955 = vweird.f32 %v811
        %v956 = vadd.s32 %v939, 3
        %v957 = vand.u32 %v956, 3
        %vm958 = vcmp.lt.s32.totalorder %v957, 2
        %vm959 = vcmp.eq.s32.totalorder %v957, 0
        %v960 = vxor.u32 %v954, 2147483648
        %v961 = vsel %vm959, %v946, %v960
        %vm962 = vcmp.eq.s32.totalorder %v957, 2
        %v963 = vxor.u32 %v946, 2147483648
        %v964 = vsel %vm962, %v963, %v954
        %v965 = vsel %vm958, %v961, %v964
        %v966 = vsel %vm955, nan, %v965
        %v967 = vand.u32 2147483647, %v811
        %vm968 = vcmp.le.f32.partialorder %v967, 0.7853982
        %vm969 = vcmp.lt.s32.totalorder %v811, 0
        %v970 = vand.u32 %v811, 2139095040
        %v971 = vshrl.u32 %v970, 23
        %v972 = vsub.s32 %v971, 127
        %v973 = vand.u32 2147483647, %v811
        %v974 = vand.u32 %v973, 8388607
        %v975 = vor.u32 %v974, 8388608
        %v976 = vsub.s32 0, %v975
        %v977 = vadd.s32 %v972, 1
        %vm978 = vcmp.gt.s32.totalorder %v977, 0
        %v979 = vsel %vm978, %v977, 0
        %v980 = vshrl.u32 %v979, 5
        %v981 = vand.u32 %v979, 31
        %v982 = vsub.s32 32, %v981
        %v983 = vshrl.u32 683565275, %v982
        %v984 = vshll.u32 683565275, %v981
        %v985 = vshrl.u32 2475754826, %v982
        %v986 = vor.u32 %v984, %v985
        %v987 = vshll.u32 2475754826, %v981
        %v988 = vshrl.u32 2131351028, %v982
        %v989 = vor.u32 %v987, %v988
        %v990 = vshll.u32 2131351028, %v981
        %v991 = vshrl.u32 2102212464, %v982
        %v992 = vor.u32 %v990, %v991
        %v993 = vshll.u32 2102212464, %v981
        %v994 = vshrl.u32 920167782, %v982
        %v995 = vor.u32 %v993, %v994
        %v996 = vshll.u32 920167782, %v981
        %v997 = vshrl.u32 1326507024, %v982
        %v998 = vor.u32 %v996, %v997
        %vm999 = vcmp.lt.s32.totalorder %v980, 1
        %vm1000 = vcmp.lt.s32.totalorder %v980, 2
        %vm1001 = vcmp.lt.s32.totalorder %v980, 3
        %vm1002 = vcmp.lt.s32.totalorder %v980, 4
        %v1003 = vsel %vm999, %v983, %v986
        %v1004 = vsel %vm1002, %v992, 2102212464
        %v1005 = vsel %vm1001, %v989, %v1004
        %v1006 = vsel %vm1000, %v1003, %v1005
        %v1007 = vsel %vm999, %v986, %v989
        %v1008 = vsel %vm1002, %v995, 920167782
        %v1009 = vsel %vm1001, %v992, %v1008
        %v1010 = vsel %vm1000, %v1007, %v1009
        %v1011 = vsel %vm999, %v989, %v992
        %v1012 = vsel %vm1002, %v998, 1326507024
        %v1013 = vsel %vm1001, %v995, %v1012
        %v1014 = vsel %vm1000, %v1011, %v1013
        %v1015 = vshll.u32 %v975, 8
        %v1016 = vand.u32 %v1015, 65535
        %v1017 = vshrl.u32 %v1015, 16
        %v1018 = vand.u32 %v1014, 65535
        %v1019 = vshrl.u32 %v1014, 16
        %v1020 = vmul.u32 %v1016, %v1018
        %v1021 = vmul.u32 %v1016, %v1019
        %v1022 = vmul.u32 %v1017, %v1018
        %v1023 = vmul.u32 %v1017, %v1019
        %v1024 = vshll.u32 %v1021, 16
        %v1025 = vshrl.u32 %v1021, 16
        %v1026 = vshll.u32 %v1022, 16
        %v1027 = vshrl.u32 %v1022, 16
        %vm1028 = vc.u32 %v1020, %v1024
        %v1029 = vsel %vm1028, 1, 0
        %v1030 = vadd.s32 %v1020, %v1024
        %v1031 = vadd.s32 %v1023, %v1029
        %vm1032 = vc.u32 %v1030, %v1026
        %v1033 = vsel %vm1032, 1, 0
        %v1034 = vadd.s32 %v1030, %v1026
        %v1035 = vadd.s32 %v1031, %v1033
        %v1036 = vadd.s32 %v1035, %v1025
        %v1037 = vadd.s32 %v1036, %v1027
        %v1038 = vand.u32 %v1015, 65535
        %v1039 = vshrl.u32 %v1015, 16
        %v1040 = vand.u32 %v1010, 65535
        %v1041 = vshrl.u32 %v1010, 16
        %v1042 = vmul.u32 %v1038, %v1040
        %v1043 = vmul.u32 %v1038, %v1041
        %v1044 = vmul.u32 %v1039, %v1040
        %v1045 = vmul.u32 %v1039, %v1041
        %v1046 = vshll.u32 %v1043, 16
        %v1047 = vshrl.u32 %v1043, 16
        %v1048 = vshll.u32 %v1044, 16
        %v1049 = vshrl.u32 %v1044, 16
        %vm1050 = vc.u32 %v1042, %v1046
        %v1051 = vsel %vm1050, 1, 0
        %v1052 = vadd.s32 %v1042, %v1046
        %v1053 = vadd.s32 %v1045, %v1051
        %vm1054 = vc.u32 %v1052, %v1048
        %v1055 = vsel %vm1054, 1, 0
        %v1056 = vadd.s32 %v1052, %v1048
        %v1057 = vadd.s32 %v1053, %v1055
        %v1058 = vadd.s32 %v1057, %v1047
        %v1059 = vadd.s32 %v1058, %v1049
        %v1060 = vmul.u32 %v1015, %v1006
        %v1061 = vadd.s32 %v1037, %v1056
        %vm1062 = vc.u32 %v1037, %v1056
        %v1063 = vadd.s32 %v1059, 1
        %v1064 = vsel %vm1062, %v1063, %v1059
        %v1065 = vadd.s32 %v1060, %v1064
        %v1066 = vadd.s32 %v1065, 536870912
        %v1067 = vshrl.u32 %v1066, 30
        %v1068 = vshll.u32 %v1067, 30
        %v1069 = vsub.s32 %v1065, %v1068
        %vm1070 = vcmp.lt.s32.totalorder %v1069, 0
        %v1071 = vsub.s32 0, %v1069
        %v1072 = vsel %vm1070, %v1071, %v1069
        %v1073 = vclz %v1072
        %v1074 = vsub.s32 %v1073, 2
        %vm1075 = vcmp.gt.s32.totalorder 0, %v1074
        %v1076 = vsel %vm1075, 0, %v1074
        %v1077 = vsub.s32 32, %v1076
        %v1078 = vshll.u32 %v1069, %v1076
        %v1079 = vshrl.u32 %v1061, %v1077
        %v1080 = vor.u32 %v1078, %v1079
        %v1081 = vsub.s32 4294967266, %v1076
        %v1082 = vadd.s32 %v1081, 127
        %v1083 = vshll.u32 %v1082, 23
        %v1084 = vor.u32 4788187, %v1083
        %v1085 = vand.u32 2147483647, %v1084
        %v1087 = vcvt.s32.f32 %v1080
        %v1088 = vmul.f32 %v1087, %v1085
        %v1089 = vxor.u32 %v1088, 2147483648
        %v1090 = vsel %vm969, %v1089, %v1088
        %v1091 = vsub.s32 4, %v1067
        %v1092 = vsel %vm969, %v1091, %v1067
        %v1093 = vsel %vm968, %v811, %v1090
        %v1094 = vsel %vm968, 0, %v1092
        %v1095 = vmul.f32 %v1093, %v1093
        %v1096 = vmul.f32 %v1095, -0.001358992
        %v1097 = vadd.f32 %v1096, 0.041655596
        %v1098 = vmul.f32 %v1095, %v1097
        %v1099 = vadd.f32 %v1098, -0.4999988
        %v1100 = vmul.f32 %v1095, %v1099
        %v1101 = vadd.f32 1.0, %v1100
        %v1102 = vmul.f32 %v1093, %v1093
        %v1103 = vmul.f32 %v1102, -0.00019511016
        %v1104 = vadd.f32 %v1103, 0.008332121
        %v1105 = vmul.f32 %v1102, %v1104
        %v1106 = vadd.f32 %v1105, -0.16666654
        %v1107 = vmul.f32 %v1102, %v1106
        %v1108 = vadd.f32 %v1107, 1.0
        %v1109 = vmul.f32 %v1108, %v1093
        %vm1110 = vweird.f32 %v811
        %v1111 = vand.u32 %v1094, 3
        %vm1112 = vcmp.lt.s32.totalorder %v1111, 2
        %vm1113 = vcmp.eq.s32.totalorder %v1111, 0
        %v1114 = vxor.u32 %v1109, 2147483648
        %v1115 = vsel %vm1113, %v1101, %v1114
        %vm1116 = vcmp.eq.s32.totalorder %v1111, 2
        %v1117 = vxor.u32 %v1101, 2147483648
        %v1118 = vsel %vm1116, %v1117, %v1109
        %v1119 = vsel %vm1112, %v1115, %v1118
        %v1120 = vsel %vm1110, nan, %v1119
        %s1121 = scalar_lea.vmem %s133, 136 [#allocation5]
        %1122 = vst [vmem:[%s1121] sm:$0xff] %v966
        %s1123 = scalar_lea.vmem %s133, 144 [#allocation5]
        %1124 = vst [vmem:[%s1123] sm:$0xff] %v1120
        %v1125 = vmul.f32 %v966, 2.0
        %v1126 = vmul.f32 %v1125, %v1120
        %v1127 = vmul.f32 %v1125, %v966
        %v1128 = vsub.f32 1.0, %v1127
        %s1129 = scalar_lea.vmem %s133, 152 [#allocation5]
        %1130 = vst [vmem:[%s1129] sm:$0xff] %v1126
        %s1131 = scalar_lea.vmem %s133, 160 [#allocation5]
        %1132 = vst [vmem:[%s1131] sm:$0xff] %v1128
        %s1133 = sand.u32 %s52, 1
        %s1134 = scalar_lea.sflag [#allocation4], %s1133
        %s1135 = sand.u32 %s52, 1
        %s1136 = smul.addr %s1135, 168
        %s1137 = scalar_lea.vmem [#allocation5], %s1136
        // Predicated region
        $region29: #{tpu_custom_call.1} parent=23 // pred_check
          %p1138 = pneg %p62
        $region30: #{tpu_custom_call.1} parent=23 // pred_check_branch
          %1140 = sbr.rel (%p1138) target = $region32
        $region31: #{tpu_custom_call.1} parent=23 // pred_region
          %1142 = vsyncadd %s1134, 0
          %s1143 = smul.addr %s18, 8
          %s1144 = scalar_lea.hbm %s1, %s1143
          %s1145 = sshll.u32 %s1137, 4
          %s1146 = int_to_ptr.vmem [resolvable:$true] %s1145
          %s1147 = sshll.u32 %s1144, 4
          %s1148 = int_to_ptr.hbm [resolvable:$true] %s1147
          %1153 = dma.vmem_to_hbm [thread:$0]  %s1146, 2688, %s1148, %s1134, 128, 384, 8
        $region32: #{tpu_custom_call.1} parent=23 // pred_fallthru
          _
      $region24: #{tpu_custom_call.1} parent=5 // pred_fallthru
        _
      %p1154 = scmp.le.s32.totalorder 2, %s13
      // Predicated region
      $region33: #{tpu_custom_call.1} parent=5 // pred_check
        %p1155 = pneg %p1154
      $region34: #{tpu_custom_call.1} parent=5 // pred_check_branch
        %1157 = sbr.rel (%p1155) target = $region36
      $region35: #{tpu_custom_call.1} parent=5 // pred_region
        %s1158 = ssub.s32 %s13, 2
        // Predicated region
        $region37: #{tpu_custom_call.1} parent=35 // pred_check
          %p1159 = pneg %p68
        $region38: #{tpu_custom_call.1} parent=35 // pred_check_branch
          %1161 = sbr.rel (%p1159) target = $region40
        $region39: #{tpu_custom_call.1} parent=35 // pred_region
          %s1162 = sand.u32 %s53, 1
          %s1163 = scalar_lea.sflag [#allocation4], %s1162
          %s1164 = sand.u32 %s53, 1
          %s1165 = smul.addr %s1164, 168
          %s1166 = scalar_lea.vmem [#allocation5], %s1165
          %1168 = dma.done %s1163, 2688
        $region40: #{tpu_custom_call.1} parent=35 // pred_fallthru
          _
      $region36: #{tpu_custom_call.1} parent=5 // pred_fallthru
        _
    $region6: #{tpu_custom_call.1} parent=1 // loop_footer
      %s17 = sadd.s32 1, %s13
    $region7: #{tpu_custom_call.1} parent=1 // loop_footer_branch
      %12 = sbr.rel target = $region3
    $region8: #{tpu_custom_call.1} parent=1 // loop_exit
      _
    %1169 = vsyncpa [#allocation3], 1
    %s1170 = scalar_lea.sflag [#allocation3], 1
    %1171 = vsyncpa %s1170, 1
    %1172 = vsyncpa [#allocation4], 1
    %s1173 = scalar_lea.sflag [#allocation4], 1
    %1174 = vsyncpa %s1173, 1

</llo_original>
